<compile_context>
chip_gen: v6e
topology: v6e:2x2x1
jax: 0.10.0
libtpu: 0.0.40
codegen_flags: <defaults>
</compile_context>

<pallas_src>
import functools

import jax
import jax.numpy as jnp
from jax.experimental import pallas as pl
from jax.experimental.pallas import tpu as pltpu

LANE = 128      # TPU vreg lane width
SUBLANE = 8     # TPU vreg sublane count
MAX_TILE_B = 8192   # keeps double-buffered working set well inside v7x's 64 MiB VMEM


def _round_up(n, m):
    return pl.cdiv(n, m) * m


def policy_kernel(x_ref, w1_ref, b1_ref, w2_ref, b2_ref, o_ref, *, action_dim):
    # Hidden layer: Linear(state_dim, 10) + ReLU
    h = jnp.dot(x_ref[...], w1_ref[...], preferred_element_type=jnp.float32)
    h = jnp.maximum(h + b1_ref[...], 0.0)                # b1 is (1, H), broadcasts

    # Output layer: Linear(10, action_dim) computed on lane-padded (A_pad=128)
    # weights -- padded logits live only in vregs, never written to HBM.
    logits = jnp.dot(h, w2_ref[...], preferred_element_type=jnp.float32)
    logits = logits + b2_ref[...]                        # b2 is (1, A_pad)

    # Lanes >= action_dim are padding (zero weight columns): exclude them from
    # the softmax so max and denominator match the unpadded math.
    col = jax.lax.broadcasted_iota(jnp.int32, logits.shape, dimension=1)
    valid = col < action_dim
    logits = jnp.where(valid, logits, -jnp.inf)

    # Numerically stable softmax over the action lanes.
    m = jnp.max(logits, axis=-1, keepdims=True)
    e = jnp.where(valid, jnp.exp(logits - m), 0.0)
    denom = jnp.sum(e, axis=-1, keepdims=True)

    # EUP approximate reciprocal (separate VLIW slot) + one Newton-Raphson
    # step to restore full f32 precision without a VPU divide.
    inv = pl.reciprocal(denom, approx=True)
    inv = inv * (2.0 - denom * inv)

    probs = e * inv
    # Unpadded store: only the real action lanes go to HBM.
    o_ref[...] = probs[:, :action_dim].astype(o_ref.dtype)


def policy_forward(x, w1, b1, w2p, b2p, action_dim, *, tile_b=4096):
    """x: (B, state_dim) f32 -> probs: (B, action_dim) f32.

    w2p / b2p are the output-layer weights lane-padded to a multiple of 128
    (built once at parameter-init time, not per call).
    """
    B, S = x.shape
    H = w1.shape[1]
    A_pad = w2p.shape[1]
    assert w1.shape == (S, H) and b1.shape == (1, H)
    assert w2p.shape == (H, A_pad) and A_pad % LANE == 0
    assert b2p.shape == (1, A_pad) and action_dim <= A_pad

    # Batch tile: multiple of 8 sublanes, capped so the double-buffered
    # working set stays small on every generation (v5e/v6e/v7x).
    tile_b = max(SUBLANE, (int(tile_b) // SUBLANE) * SUBLANE)
    tile_b = min(tile_b, MAX_TILE_B)
    tile_b = min(tile_b, _round_up(B, SUBLANE))
    # v7x has 2 TensorCores: ensure the "parallel" batch grid has >= 2 steps
    # whenever there is enough work so both cores get a share.
    if B >= 2 * SUBLANE:
        tile_b = min(tile_b, _round_up(pl.cdiv(B, 2), SUBLANE))

    grid = (pl.cdiv(B, tile_b),)   # ragged last tile: reads padded, writes clipped

    # Scoped-VMEM budget: x tile + out tile (both lane-padded to 128 in VMEM),
    # double-buffered, plus resident weights and headroom.  Clamped well under
    # v7x's 64 MiB physical VMEM.
    vmem_bytes = 2 * 2 * tile_b * LANE * 4 + (4 << 20)
    vmem_bytes = min(max(vmem_bytes, 16 << 20), 48 << 20)

    kernel = functools.partial(policy_kernel, action_dim=action_dim)

    return pl.pallas_call(
        kernel,
        out_shape=jax.ShapeDtypeStruct((B, action_dim), jnp.float32),
        grid_spec=pltpu.PrefetchScalarGridSpec(
            num_scalar_prefetch=0,
            grid=grid,
            in_specs=[
                # Batch tile of activations (double-buffered across the grid).
                pl.BlockSpec((tile_b, S), lambda i: (i, 0)),
                # Weights/biases: constant index_map -> resident in VMEM.
                pl.BlockSpec((S, H), lambda i: (0, 0)),
                pl.BlockSpec((1, H), lambda i: (0, 0)),
                pl.BlockSpec((H, A_pad), lambda i: (0, 0)),
                pl.BlockSpec((1, A_pad), lambda i: (0, 0)),
            ],
            # Unpadded output block: last dim == full array dim (legal).
            out_specs=pl.BlockSpec((tile_b, action_dim), lambda i: (i, 0)),
        ),
        compiler_params=pltpu.CompilerParams(
            dimension_semantics=("parallel",),
            vmem_limit_bytes=vmem_bytes,
        ),
    )(x, w1, b1, w2p, b2p)


def xavier_normal(key, fan_in, fan_out):
    # Matches torch.nn.init.xavier_normal_: std = sqrt(2 / (fan_in + fan_out))
    std = (2.0 / (fan_in + fan_out)) ** 0.5
    return std * jax.random.normal(key, (fan_in, fan_out), dtype=jnp.float32)


def init_policy_params(key, state_dim, action_dim, hidden=10):
    """Xavier-normal weights, zero biases; output layer lane-padded ONCE here."""
    k_w1, k_w2 = jax.random.split(key)
    w1 = xavier_normal(k_w1, state_dim, hidden)           # (state_dim, 10)
    b1 = jnp.zeros((1, hidden), dtype=jnp.float32)        # (1, 10)
    w2 = xavier_normal(k_w2, hidden, action_dim)          # (10, action_dim)
    b2 = jnp.zeros((1, action_dim), dtype=jnp.float32)    # (1, action_dim)

    a_pad = max(LANE, pl.cdiv(action_dim, LANE) * LANE)
    w2p = jnp.zeros((hidden, a_pad), jnp.float32).at[:, :action_dim].set(w2)
    b2p = jnp.zeros((1, a_pad), jnp.float32).at[:, :action_dim].set(b2)
    return (w1, b1, w2, b2, w2p, b2p)


if __name__ == "__main__":
    batch = 8
    state_dim = 4
    hidden = 10
    action_dim = 6

    key = jax.random.PRNGKey(0)
    k_x, k_params = jax.random.split(key)

    x = jax.random.normal(k_x, (batch, state_dim), dtype=jnp.float32)
    w1, b1, w2, b2, w2p, b2p = init_policy_params(k_params, state_dim, action_dim, hidden)

    out = policy_forward(x, w1, b1, w2p, b2p, action_dim)
    out = jax.block_until_ready(out)

    # Sanity check against a pure-JAX reference.
    h_ref = jnp.maximum(x @ w1 + b1, 0.0)
    ref = jax.nn.softmax(h_ref @ w2 + b2, axis=1)
    assert out.shape == (batch, action_dim)
    assert jnp.allclose(out, ref, atol=1e-5, rtol=1e-5)
    assert jnp.allclose(jnp.sum(out, axis=1), 1.0, atol=1e-5)

    print("KERNEL_OK")
</pallas_src>

<mosaic_0001>
module attributes {stable_mosaic.version = 11 : i64} {
  func.func @policy_kernel(%arg0: i32, %arg1: memref<8x4xf32, #tpu.memory_space<vmem>>, %arg2: memref<4x10xf32, #tpu.memory_space<vmem>>, %arg3: memref<1x10xf32, #tpu.memory_space<vmem>>, %arg4: memref<10x128xf32, #tpu.memory_space<vmem>>, %arg5: memref<1x128xf32, #tpu.memory_space<vmem>>, %arg6: memref<8x6xf32, #tpu.memory_space<vmem>>) attributes {dimension_semantics = [#tpu.dimension_semantics<parallel>], iteration_bounds = array<i64: 1>, scalar_prefetch = 0 : i64, scratch_operands = 0 : i64, tpu.core_type = #tpu.core_type<tc>, window_params = [{transform_indices = @transform_0, window_bounds = array<i64: 8, 4>}, {pipeline_mode = #tpu.pipeline_mode<synchronous>, transform_indices = @transform_1, window_bounds = array<i64: 4, 10>}, {pipeline_mode = #tpu.pipeline_mode<synchronous>, transform_indices = @transform_2, window_bounds = array<i64: 1, 10>}, {pipeline_mode = #tpu.pipeline_mode<synchronous>, transform_indices = @transform_3, window_bounds = array<i64: 10, 128>}, {pipeline_mode = #tpu.pipeline_mode<synchronous>, transform_indices = @transform_4, window_bounds = array<i64: 1, 128>}, {transform_indices = @transform_5, window_bounds = array<i64: 8, 6>}]} {
    %c0 = arith.constant 0 : index
    %c0_0 = arith.constant 0 : index
    %0 = vector.load %arg1[%c0, %c0_0] : memref<8x4xf32, #tpu.memory_space<vmem>>, vector<8x4xf32>
    %c0_1 = arith.constant 0 : index
    %c0_2 = arith.constant 0 : index
    %1 = vector.load %arg2[%c0_1, %c0_2] : memref<4x10xf32, #tpu.memory_space<vmem>>, vector<4x10xf32>
    %cst = arith.constant dense<0.000000e+00> : vector<8x10xf32>
    %2 = tpu.matmul %0, %1, %cst {dimension_numbers = #tpu.dot_dimension_numbers<[1], [0], [0], [1], [0, 0, 1, 1], [], []>} : vector<8x4xf32>, vector<4x10xf32>, vector<8x10xf32> -> vector<8x10xf32>
    %c0_3 = arith.constant 0 : index
    %c0_4 = arith.constant 0 : index
    %3 = vector.load %arg3[%c0_3, %c0_4] : memref<1x10xf32, #tpu.memory_space<vmem>>, vector<1x10xf32>
    %4 = vector.broadcast %3 : vector<1x10xf32> to vector<8x10xf32>
    %5 = arith.addf %2, %4 : vector<8x10xf32>
    %cst_5 = arith.constant 0.000000e+00 : f32
    %6 = vector.broadcast %cst_5 : f32 to vector<8x10xf32>
    %7 = arith.maximumf %5, %6 : vector<8x10xf32>
    %c0_6 = arith.constant 0 : index
    %c0_7 = arith.constant 0 : index
    %8 = vector.load %arg4[%c0_6, %c0_7] : memref<10x128xf32, #tpu.memory_space<vmem>>, vector<10x128xf32>
    %cst_8 = arith.constant dense<0.000000e+00> : vector<8x128xf32>
    %9 = tpu.matmul %7, %8, %cst_8 {dimension_numbers = #tpu.dot_dimension_numbers<[1], [0], [0], [1], [0, 0, 1, 1], [], []>} : vector<8x10xf32>, vector<10x128xf32>, vector<8x128xf32> -> vector<8x128xf32>
    %c0_9 = arith.constant 0 : index
    %c0_10 = arith.constant 0 : index
    %10 = vector.load %arg5[%c0_9, %c0_10] : memref<1x128xf32, #tpu.memory_space<vmem>>, vector<1x128xf32>
    %11 = vector.broadcast %10 : vector<1x128xf32> to vector<8x128xf32>
    %12 = arith.addf %9, %11 : vector<8x128xf32>
    %13 = tpu.iota {dimensions = array<i32: 1>} : vector<8x128xi32>
    %c6_i32 = arith.constant 6 : i32
    %14 = vector.broadcast %c6_i32 : i32 to vector<8x128xi32>
    %15 = arith.cmpi slt, %13, %14 : vector<8x128xi32>
    %cst_11 = arith.constant 0xFF800000 : f32
    %16 = vector.broadcast %cst_11 : f32 to vector<8x128xf32>
    %17 = arith.select %15, %12, %16 : vector<8x128xi1>, vector<8x128xf32>
    %cst_12 = arith.constant dense<0xFF800000> : vector<8xf32>
    %18 = vector.multi_reduction <maximumf>, %17, %cst_12 [1] : vector<8x128xf32> to vector<8xf32>
    %19 = vector.shape_cast %18 : vector<8xf32> to vector<8x1xf32>
    %20 = vector.broadcast %19 : vector<8x1xf32> to vector<8x128xf32>
    %21 = arith.subf %17, %20 : vector<8x128xf32>
    %22 = math.exp %21 : vector<8x128xf32>
    %cst_13 = arith.constant 0.000000e+00 : f32
    %23 = vector.broadcast %cst_13 : f32 to vector<8x128xf32>
    %24 = arith.select %15, %22, %23 : vector<8x128xi1>, vector<8x128xf32>
    %cst_14 = arith.constant dense<0.000000e+00> : vector<8xf32>
    %25 = vector.multi_reduction <add>, %24, %cst_14 [1] : vector<8x128xf32> to vector<8xf32>
    %26 = vector.shape_cast %25 : vector<8xf32> to vector<8x1xf32>
    %27 = tpu.reciprocal %26 {approx = true} : vector<8x1xf32> -> vector<8x1xf32>
    %28 = arith.mulf %26, %27 : vector<8x1xf32>
    %cst_15 = arith.constant 2.000000e+00 : f32
    %29 = vector.broadcast %cst_15 : f32 to vector<8x1xf32>
    %30 = arith.subf %29, %28 : vector<8x1xf32>
    %31 = arith.mulf %27, %30 : vector<8x1xf32>
    %32 = vector.broadcast %31 : vector<8x1xf32> to vector<8x128xf32>
    %33 = arith.mulf %24, %32 : vector<8x128xf32>
    %34 = vector.extract_strided_slice %33 {offsets = [0, 0], sizes = [8, 6], strides = [1, 1]} : vector<8x128xf32> to vector<8x6xf32>
    %c0_16 = arith.constant 0 : index
    %c0_17 = arith.constant 0 : index
    %35 = vector.load %arg6[%c0_16, %c0_17] : memref<8x6xf32, #tpu.memory_space<vmem>>, vector<8x6xf32>
    tpu.vector_store %arg6[%c0_16, %c0_17], %34 {strides = array<i32>} : memref<8x6xf32, #tpu.memory_space<vmem>>, vector<8x6xf32>,
    return
  }
  func.func @transform_0(%arg0: i32) -> (i32, i32) {
    %c0_i32 = arith.constant 0 : i32
    %c0_i32_0 = arith.constant 0 : i32
    return %arg0, %c0_i32 : i32, i32
  }
  func.func @transform_1(%arg0: i32) -> (i32, i32) {
    %c0_i32 = arith.constant 0 : i32
    %c0_i32_0 = arith.constant 0 : i32
    %c0_i32_1 = arith.constant 0 : i32
    return %c0_i32, %c0_i32_0 : i32, i32
  }
  func.func @transform_2(%arg0: i32) -> (i32, i32) {
    %c0_i32 = arith.constant 0 : i32
    %c0_i32_0 = arith.constant 0 : i32
    %c0_i32_1 = arith.constant 0 : i32
    return %c0_i32, %c0_i32_0 : i32, i32
  }
  func.func @transform_3(%arg0: i32) -> (i32, i32) {
    %c0_i32 = arith.constant 0 : i32
    %c0_i32_0 = arith.constant 0 : i32
    %c0_i32_1 = arith.constant 0 : i32
    return %c0_i32, %c0_i32_0 : i32, i32
  }
  func.func @transform_4(%arg0: i32) -> (i32, i32) {
    %c0_i32 = arith.constant 0 : i32
    %c0_i32_0 = arith.constant 0 : i32
    %c0_i32_1 = arith.constant 0 : i32
    return %c0_i32, %c0_i32_0 : i32, i32
  }
  func.func @transform_5(%arg0: i32) -> (i32, i32) {
    %c0_i32 = arith.constant 0 : i32
    %c0_i32_0 = arith.constant 0 : i32
    return %arg0, %c0_i32 : i32, i32
  }
}

</mosaic_0001>

<llo_original>
// kernel: tpu_custom_call.1
$region0: #{tpu_custom_call.1}
  #allocation0 [shape = 'u32[]', space=smem, size = 0x4, offset = 0x4, fixed_abs, tag = 'smem constant byte address 0x4 - core index']
  #allocation1 [shape = 'u32[144,128]{1,0:T(1,128)}', space=vmem, size = 0x12000, scoped, tag = 'internal scratch']
  %s0 = inlined_call_operand.vmem [shape: f32[8,4], index: 0, kind: input, shape index: {}]
  %s1 = inlined_call_operand.hbm [shape: f32[4,10], index: 1, kind: input, shape index: {}]
  %s2 = inlined_call_operand.vmem [shape: f32[1,10], index: 2, kind: input, shape index: {}]
  %s3 = inlined_call_operand.vmem [shape: f32[10,128], index: 3, kind: input, shape index: {}]
  %s4 = inlined_call_operand.vmem [shape: f32[1,128], index: 4, kind: input, shape index: {}]
  %s5 = inlined_call_operand.hbm [shape: f32[8,6], index: 5, kind: output, shape index: {}]
  %s6 = sld [smem:[#allocation0]]
  $region34: #{tpu_custom_call.1} parent=0
    _
  %s8 = ssub.s32 1, %s6
  %s9 = scalar_select 0, %s8, %s6
  $region1: #{tpu_custom_call.1} parent=0
    #allocation2 [shape = 'u8[2048]{0}', space=vmem, size = 0x800, scoped, tag = 'input window, operand 1, single buffered']
    #allocation3 [shape = 's32[1]{0}', space=sflag, size = 0x4, scoped, tag = 'scoped memory for tpu_custom_call.1']
    #allocation4 [shape = 's32[1]{0}', space=sflag, size = 0x4, scoped, tag = 'scoped memory for tpu_custom_call.1']
    #allocation5 [shape = 'u8[4096]{0}', space=vmem, size = 0x1000, scoped, tag = 'output window, operand 0, single buffered']
    %10 = vsyncpa [#allocation3], 0
    %11 = vsyncpa [#allocation4], 0
    // Predicated region
    $region2: #{tpu_custom_call.1} parent=1 // pred_check
      _
    $region3: #{tpu_custom_call.1} parent=1 // pred_check_branch
      %13 = sbr.rel (0) target = $region5
    $region4: #{tpu_custom_call.1} parent=1 // pred_region
      _
    $region5: #{tpu_custom_call.1} parent=1 // pred_fallthru
      _
    // Predicated region
    $region6: #{tpu_custom_call.1} parent=1 // pred_check
      _
    $region7: #{tpu_custom_call.1} parent=1 // pred_check_branch
      %15 = sbr.rel (0) target = $region9
    $region8: #{tpu_custom_call.1} parent=1 // pred_region
      %s17 = ssub.s32 64, 64
      %18 = vsyncadd [#allocation3], %s17
      %s20 = sshll.u32 [#allocation2], 4
      %s21 = int_to_ptr.vmem [resolvable:$true] %s20
      %23 = dma.hbm_to_vmem [thread:$0]  %s1, 64, %s21, [#allocation3]
    $region9: #{tpu_custom_call.1} parent=1 // pred_fallthru
      _
    // Predicated region
    $region10: #{tpu_custom_call.1} parent=1 // pred_check
      _
    $region11: #{tpu_custom_call.1} parent=1 // pred_check_branch
      %25 = sbr.rel (0) target = $region13
    $region12: #{tpu_custom_call.1} parent=1 // pred_region
      _
    $region13: #{tpu_custom_call.1} parent=1 // pred_fallthru
      _
    // Predicated region
    $region14: #{tpu_custom_call.1} parent=1 // pred_check
      _
    $region15: #{tpu_custom_call.1} parent=1 // pred_check_branch
      %27 = sbr.rel (0) target = $region17
    $region16: #{tpu_custom_call.1} parent=1 // pred_region
      _
    $region17: #{tpu_custom_call.1} parent=1 // pred_fallthru
      _
    // Predicated region
    $region18: #{tpu_custom_call.1} parent=1 // pred_check
      _
    $region19: #{tpu_custom_call.1} parent=1 // pred_check_branch
      %29 = sbr.rel (0) target = $region21
    $region20: #{tpu_custom_call.1} parent=1 // pred_region
      _
    $region21: #{tpu_custom_call.1} parent=1 // pred_fallthru
      _
    // Predicated region
    $region22: #{tpu_custom_call.1} parent=1 // pred_check
      _
    $region23: #{tpu_custom_call.1} parent=1 // pred_check_branch
      %31 = sbr.rel (0) target = $region25
    $region24: #{tpu_custom_call.1} parent=1 // pred_region
      %32 = dma.done [#allocation3], 64
    $region25: #{tpu_custom_call.1} parent=1 // pred_fallthru
      _
    %v33 = vld [vmem:[%s0] sm:$0xff]
    %v34 = vld [vmem:[#allocation2] sm:$0xf]
    %v35 = vld [vmem:[%s2] sm:$0x1]
    %v37 = vlaneseq
    %v38 = vshrl.u32 %v37, 7
    %v39 = vsub.s32 0, %v38
    %v40 = vrot.slane %v35, %v39
    %vm42 = vcmask 31744
    %v44 = vsel %vm42, %v33, 0
    %vm46 = vcmask 1043456
    %v48 = vsel %vm46, %v34, 0
    %50 = vmatprep.subr.mxu0 0.0
    %51 = vmatpush1.msra.mxu0 0.0
    %52 = vmatprep.subr.mxu0 0.0
    %53 = vmatpush1.msra.mxu0 0.0
    %54 = vmatprep.subr.mxu0 0.0
    %55 = vmatpush1.msra.mxu0 0.0
    %56 = vmatprep.subr.mxu0 0.0
    %57 = vmatpush1.msra.mxu0 0.0
    %58 = vmatprep.subr.mxu0 0.0
    %59 = vmatpush1.msra.mxu0 0.0
    %60 = vmatprep.subr.mxu0 0.0
    %61 = vmatpush1.msra.mxu0 0.0
    %62 = vmatprep.subr.mxu0 0.0
    %63 = vmatpush1.msra.mxu0 0.0
    %64 = vmatprep.subr.mxu0 0.0
    %65 = vmatpush1.msra.mxu0 0.0
    %66 = vmatprep.subr.mxu0 0.0
    %67 = vmatpush1.msra.mxu0 0.0
    %68 = vmatprep.subr.mxu0 0.0
    %69 = vmatpush1.msra.mxu0 0.0
    %70 = vmatprep.subr.mxu0 0.0
    %71 = vmatpush1.msra.mxu0 0.0
    %72 = vmatprep.subr.mxu0 0.0
    %73 = vmatpush1.msra.mxu0 0.0
    %74 = vmatprep.subr.mxu0 0.0
    %75 = vmatpush1.msra.mxu0 0.0
    %76 = vmatprep.subr.mxu0 0.0
    %77 = vmatpush1.msra.mxu0 0.0
    %78 = vmatprep.subr.mxu0 0.0
    %79 = vmatpush1.msra.mxu0 0.0
    %80 = vmatprep.subr.mxu0 0.0
    %81 = vmatpush1.msra.mxu0 %v48
    %82 = vmatprep.subr.mxu0 0.0
    %83 = vmatpush2.msra.mxu0 0.0
    %84 = vmatprep.subr.mxu0 0.0
    %85 = vmatpush2.msra.mxu0 0.0
    %86 = vmatprep.subr.mxu0 0.0
    %87 = vmatpush2.msra.mxu0 0.0
    %88 = vmatprep.subr.mxu0 0.0
    %89 = vmatpush2.msra.mxu0 0.0
    %90 = vmatprep.subr.mxu0 0.0
    %91 = vmatpush2.msra.mxu0 0.0
    %92 = vmatprep.subr.mxu0 0.0
    %93 = vmatpush2.msra.mxu0 0.0
    %94 = vmatprep.subr.mxu0 0.0
    %95 = vmatpush2.msra.mxu0 0.0
    %96 = vmatprep.subr.mxu0 0.0
    %97 = vmatpush2.msra.mxu0 0.0
    %98 = vmatprep.subr.mxu0 0.0
    %99 = vmatpush2.msra.mxu0 0.0
    %100 = vmatprep.subr.mxu0 0.0
    %101 = vmatpush2.msra.mxu0 0.0
    %102 = vmatprep.subr.mxu0 0.0
    %103 = vmatpush2.msra.mxu0 0.0
    %104 = vmatprep.subr.mxu0 0.0
    %105 = vmatpush2.msra.mxu0 0.0
    %106 = vmatprep.subr.mxu0 0.0
    %107 = vmatpush2.msra.mxu0 0.0
    %108 = vmatprep.subr.mxu0 0.0
    %109 = vmatpush2.msra.mxu0 0.0
    %110 = vmatprep.subr.mxu0 0.0
    %111 = vmatpush2.msra.mxu0 0.0
    %112 = vmatprep.subr.mxu0 0.0
    %113 = vmatpush2.msra.mxu0 0.0
    %114 = vmatprep.mubr.f32.mxu0 0.0
    %115 = vmatmul.mubr.f32.gmra.mxu0 %v44
    %v116 = vpop.f32.mrf.mxu0
    %v117 = vadd.f32 %v40, %v116
    %v118 = vpop.f32.mrf.mxu0
    %119 = vdwg.mxu0
    %v120 = vmax.f32 %v117, 0.0
    %v121 = vld [vmem:[%s3] sm:$0xff]
    %v122 = vld [vmem:[%s3 + $0x8] sm:$0x3]
    %v123 = vld [vmem:[%s4] sm:$0x1]
    %v125 = vlaneseq
    %v126 = vshrl.u32 %v125, 7
    %v127 = vsub.s32 0, %v126
    %v128 = vrot.slane %v123, %v127
    %vm130 = vcmask 80896
    %v132 = vsel %vm130, %v120, 0
    %vm134 = vcmask 1041408
    %v136 = vsel %vm134, %v122, 0
    %138 = vmatprep.subr.mxu0 0.0
    %139 = vmatpush1.msra.mxu0 0.0
    %140 = vmatprep.subr.mxu0 0.0
    %141 = vmatpush1.msra.mxu0 0.0
    %142 = vmatprep.subr.mxu0 0.0
    %143 = vmatpush1.msra.mxu0 0.0
    %144 = vmatprep.subr.mxu0 0.0
    %145 = vmatpush1.msra.mxu0 0.0
    %146 = vmatprep.subr.mxu0 0.0
    %147 = vmatpush1.msra.mxu0 0.0
    %148 = vmatprep.subr.mxu0 0.0
    %149 = vmatpush1.msra.mxu0 0.0
    %150 = vmatprep.subr.mxu0 0.0
    %151 = vmatpush1.msra.mxu0 0.0
    %152 = vmatprep.subr.mxu0 0.0
    %153 = vmatpush1.msra.mxu0 0.0
    %154 = vmatprep.subr.mxu0 0.0
    %155 = vmatpush1.msra.mxu0 0.0
    %156 = vmatprep.subr.mxu0 0.0
    %157 = vmatpush1.msra.mxu0 0.0
    %158 = vmatprep.subr.mxu0 0.0
    %159 = vmatpush1.msra.mxu0 0.0
    %160 = vmatprep.subr.mxu0 0.0
    %161 = vmatpush1.msra.mxu0 0.0
    %162 = vmatprep.subr.mxu0 0.0
    %163 = vmatpush1.msra.mxu0 0.0
    %164 = vmatprep.subr.mxu0 0.0
    %165 = vmatpush1.msra.mxu0 0.0
    %166 = vmatprep.subr.mxu0 0.0
    %167 = vmatpush1.msra.mxu0 %v136
    %168 = vmatprep.subr.mxu0 0.0
    %169 = vmatpush1.msra.mxu0 %v121
    %170 = vmatprep.subr.mxu0 0.0
    %171 = vmatpush2.msra.mxu0 0.0
    %172 = vmatprep.subr.mxu0 0.0
    %173 = vmatpush2.msra.mxu0 0.0
    %174 = vmatprep.subr.mxu0 0.0
    %175 = vmatpush2.msra.mxu0 0.0
    %176 = vmatprep.subr.mxu0 0.0
    %177 = vmatpush2.msra.mxu0 0.0
    %178 = vmatprep.subr.mxu0 0.0
    %179 = vmatpush2.msra.mxu0 0.0
    %180 = vmatprep.subr.mxu0 0.0
    %181 = vmatpush2.msra.mxu0 0.0
    %182 = vmatprep.subr.mxu0 0.0
    %183 = vmatpush2.msra.mxu0 0.0
    %184 = vmatprep.subr.mxu0 0.0
    %185 = vmatpush2.msra.mxu0 0.0
    %186 = vmatprep.subr.mxu0 0.0
    %187 = vmatpush2.msra.mxu0 0.0
    %188 = vmatprep.subr.mxu0 0.0
    %189 = vmatpush2.msra.mxu0 0.0
    %190 = vmatprep.subr.mxu0 0.0
    %191 = vmatpush2.msra.mxu0 0.0
    %192 = vmatprep.subr.mxu0 0.0
    %193 = vmatpush2.msra.mxu0 0.0
    %194 = vmatprep.subr.mxu0 0.0
    %195 = vmatpush2.msra.mxu0 0.0
    %196 = vmatprep.subr.mxu0 0.0
    %197 = vmatpush2.msra.mxu0 0.0
    %198 = vmatprep.subr.mxu0 0.0
    %199 = vmatpush2.msra.mxu0 0.0
    %200 = vmatprep.subr.mxu0 0.0
    %201 = vmatpush2.msra.mxu0 0.0
    %202 = vmatprep.mubr.f32.mxu0 0.0
    %203 = vmatmul.mubr.f32.gmra.mxu0 %v132
    %v204 = vpop.f32.mrf.mxu0
    %v205 = vadd.f32 %v128, %v204
    %v206 = vpop.f32.mrf.mxu0
    %207 = vdwg.mxu0
    %v208 = vlaneseq
    %v209 = vand.u32 %v208, 127
    %vm210 = vcmp.lt.s32.totalorder %v209, 6
    %v211 = vsel %vm210, %v205, -inf
    %212 = vmax.xlane.f32.xlu0 %v211
    %v213 = vpop.xlane.xlu0 %212
    %v214 = vsub.f32 %v211, %v213
    %v215 = vmul.f32 %v214, 1.442695
    %v216 = vpow.pop %v215
    %v217 = vsel %vm210, %v216, 0.0
    %218 = vadd.xlane.f32.xlu0 %v217
    %v219 = vpop.xlane.xlu0 %218
    %v220 = vrcp.pop %v219
    %v221 = vmul.f32 %v219, %v220
    %v222 = vsub.f32 2.0, %v221
    %v223 = vmul.f32 %v220, %v222
    %v224 = vmul.f32 %v217, %v223
    %vm225 = vcmask 48128
    %226 = vst.msk [vmem:[#allocation5] sm:$0xff] %vm225, %v224
    // Predicated region
    $region26: #{tpu_custom_call.1} parent=1 // pred_check
      _
    $region27: #{tpu_custom_call.1} parent=1 // pred_check_branch
      %228 = sbr.rel (0) target = $region29
    $region28: #{tpu_custom_call.1} parent=1 // pred_region
      %s230 = ssub.s32 128, 128
      %231 = vsyncadd [#allocation4], %s230
      %s233 = sshll.u32 [#allocation5], 4
      %s234 = int_to_ptr.vmem [resolvable:$true] %s233
      %236 = dma.vmem_to_hbm [thread:$0]  %s234, 128, %s5, [#allocation4]
    $region29: #{tpu_custom_call.1} parent=1 // pred_fallthru
      _
    // Predicated region
    $region30: #{tpu_custom_call.1} parent=1 // pred_check
      _
    $region31: #{tpu_custom_call.1} parent=1 // pred_check_branch
      %238 = sbr.rel (0) target = $region33
    $region32: #{tpu_custom_call.1} parent=1 // pred_region
      %239 = dma.done [#allocation4], 128
    $region33: #{tpu_custom_call.1} parent=1 // pred_fallthru
      _
    %240 = vsyncpa [#allocation3], 1
    %241 = vsyncpa [#allocation4], 1

</llo_original>
